<compile_context>
chip_gen: v7x
topology: tpu7x:2x2x1
jax: 0.10.0
libtpu: 0.0.40
codegen_flags: <defaults>
</compile_context>

<pallas_src>
import jax
import jax.numpy as jnp
from jax.experimental import pallas as pl
from jax.experimental.pallas import tpu as pltpu

LANE = 128


def _round_up(n, m):
    return ((n + m - 1) // m) * m


def _make_kernel(num_layers, d_in):
    def kernel(x_ref, w_ref, vb_ref, out_ref):
        # ---- layer 1: [TB, D] @ [D, P] -----------------------------------
        # x streams at its native feature width D; only the first D rows of
        # the zero-padded first weight matrix participate, so no wrapper-side
        # feature padding of x is needed.
        h = jnp.dot(x_ref[...].astype(w_ref.dtype), w_ref[0, :d_in, :],
                    preferred_element_type=jnp.float32)
        h = jnp.tanh(h + vb_ref[0, :][None, :])
        # ---- layers 2..L: [TB, P] @ [P, P] --------------------------------
        for l in range(1, num_layers):               # static unroll (L <= 3)
            h = jnp.dot(h.astype(w_ref.dtype), w_ref[l],
                        preferred_element_type=jnp.float32)
            h = jnp.tanh(h + vb_ref[l, :][None, :])
        # ---- final Linear(hidden[-1] -> 1) as a lane reduction -------------
        # VPU mul + XLU reduce; keeps the MXU slot free and avoids a [*, 1]
        # lane layout.  Padded lanes are exact zeros (tanh(0)*0), so the
        # reduction over P lanes equals the reduction over the true width.
        wo = vb_ref[num_layers, :][None, :]          # [1, P] f32
        bo = vb_ref[num_layers + 1, 0]               # scalar f32
        row = jnp.sum(h * wo, axis=-1) + bo          # [TB]
        out_ref[...] = row[None, :]                  # lane-dense [1, TB]
    return kernel


def _choose_batch_tiling(batch, batch_tile):
    """Pick (TB, Bp): TB a multiple of 128 (lane-dense output tiles); when the
    batch is big enough, use >= 2 grid steps so the "parallel" batch axis can
    shard across v7x's two TensorCores and the x/out pipeline overlaps."""
    batch_tile = max(LANE, _round_up(batch_tile, LANE))
    bp = _round_up(batch, LANE)
    if bp <= batch_tile:
        if bp >= 2 * LANE:
            tb = _round_up(pl.cdiv(bp, 2), LANE)     # >= 2 tiles (v7x megacore)
        else:
            tb = bp                                  # single 128-lane tile
    else:
        tb = batch_tile
    bp = _round_up(bp, tb)
    return tb, bp


def nts_mlp_forward(x, params, *, batch_tile=1024):
    """x: [B, input_size] float32.  params: packed dict from init_params.

    Returns [B] float32 (matches PyTorch .flatten()).
    """
    w_stack = params["w_stack"]        # [L, P, P]   bf16 (default)
    vb_stack = params["vb_stack"]      # [L+2, P]    f32
    dims = params["dims"]
    L, P, _ = w_stack.shape
    B, D = x.shape
    assert D == dims[0], f"x feature dim {D} != model input_size {dims[0]}"

    TB, Bp = _choose_batch_tiling(B, batch_tile)
    # Small-batch only: pad x rows up to one tile (a few KB; zero rows are
    # inert and their output lanes are sliced off).  For B >= TB the batch is
    # NOT padded: a ragged last tile reads undefined rows whose garbage stays
    # confined to output lanes that are sliced off below, so no extra HBM
    # traffic is spent on a wrapper-side pad in the mem-bound regime.
    if B < TB:
        x = jnp.pad(x, ((0, TB - B), (0, 0)))
    grid = (Bp // TB,)

    flops = 2 * Bp * (D * P + (L - 1) * P * P) + 3 * Bp * P
    bytes_accessed = (x.size * x.dtype.itemsize
                      + w_stack.size * w_stack.dtype.itemsize
                      + vb_stack.size * vb_stack.dtype.itemsize
                      + 4 * Bp)

    # NOTE: with batch_tile <= ~2048 and P = 128 all buffers stay far below
    # even v5e's 16 MiB scoped-VMEM default; set vmem_limit_bytes only if
    # batch_tile is pushed well beyond that.
    out = pl.pallas_call(
        _make_kernel(L, D),
        out_shape=jax.ShapeDtypeStruct((1, Bp), jnp.float32),
        grid_spec=pltpu.PrefetchScalarGridSpec(
            num_scalar_prefetch=0,
            grid=grid,
            in_specs=[
                # x: streamed over the batch axis at its native feature width.
                pl.BlockSpec((TB, D), lambda i: (i, 0)),
                # weights: constant block index -> DMA'd once, VMEM-resident.
                pl.BlockSpec((L, P, P), lambda i: (0, 0, 0)),
                # hidden biases + final weight row (wo) + final bias (bo).
                pl.BlockSpec((L + 2, P), lambda i: (0, 0)),
            ],
            # lane-dense output: batch on the lane axis, TB a multiple of 128
            # -> unmasked vst writeback.
            out_specs=pl.BlockSpec((1, TB), lambda i: (0, i)),
        ),
        compiler_params=pltpu.CompilerParams(
            dimension_semantics=("parallel",)),
        cost_estimate=pl.CostEstimate(
            flops=int(flops),
            transcendentals=int(Bp * P * L),
            bytes_accessed=int(bytes_accessed)),
    )(x, w_stack, vb_stack)

    # PyTorch: self.linear(h).flatten() -> shape [B]
    return out[0, :B]


def init_params(key, input_size, hidden_size, *, weights_dtype=jnp.bfloat16):
    """Build packed parameters, mimicking nn.Linear U(-1/sqrt(fan_in)) init.

    Weights are stored transposed ([in, out]), zero-padded to a common
    128-lane-aligned square width P and stacked into a single [L, P, P]
    buffer (bf16 by default: single-pass MXU, half the weight DMA).  Hidden
    biases, the final weight row (wo) and the final bias (bo) are packed into
    one [L+2, P] f32 buffer.  Zero padding is mathematically inert: padded
    input/hidden lanes hit zero weight rows and give tanh(0) = 0.
    """
    hidden_size = tuple(hidden_size)
    L = len(hidden_size)
    assert 1 <= L <= 3
    dims = (input_size,) + hidden_size            # layer l: dims[l] -> dims[l+1]
    P = max(LANE, _round_up(max(dims), LANE))     # 128-lane-aligned width

    w_stack = jnp.zeros((L, P, P), jnp.float32)
    vb_stack = jnp.zeros((L + 2, P), jnp.float32)

    for l in range(L):
        fan_in, fan_out = dims[l], dims[l + 1]
        key, kw, kb = jax.random.split(key, 3)
        bound = 1.0 / (fan_in ** 0.5)
        w = jax.random.uniform(kw, (fan_in, fan_out), jnp.float32, -bound, bound)
        b = jax.random.uniform(kb, (fan_out,), jnp.float32, -bound, bound)
        w_stack = w_stack.at[l, :fan_in, :fan_out].set(w)
        vb_stack = vb_stack.at[l, :fan_out].set(b)

    # Final linear: hidden[-1] -> 1, stored as a row (wo) + scalar (bo).
    fan_in = hidden_size[-1]
    key, kw, kb = jax.random.split(key, 3)
    bound = 1.0 / (fan_in ** 0.5)
    wo = jax.random.uniform(kw, (fan_in,), jnp.float32, -bound, bound)
    bo = jax.random.uniform(kb, (), jnp.float32, -bound, bound)
    vb_stack = vb_stack.at[L, :fan_in].set(wo)
    vb_stack = vb_stack.at[L + 1, 0].set(bo)

    return {"w_stack": w_stack.astype(weights_dtype),
            "vb_stack": vb_stack,
            "dims": dims}


def reference_forward(x, params, *, weights_dtype=None):
    """Pure-JAX reference (unpacks the packed buffers).

    With weights_dtype=None it follows the same bf16-weight / f32-accumulate
    path as the kernel; pass jnp.float32 for PyTorch-exact f32 semantics.
    """
    w_stack, vb = params["w_stack"], params["vb_stack"]
    if weights_dtype is not None:
        w_stack = w_stack.astype(weights_dtype)
    dims = params["dims"]
    L = len(dims) - 1
    h = x
    for l in range(L):
        fi, fo = dims[l], dims[l + 1]
        h = jnp.tanh(
            jnp.dot(h.astype(w_stack.dtype), w_stack[l, :fi, :fo],
                    preferred_element_type=jnp.float32) + vb[l, :fo])
    fo = dims[-1]
    return jnp.sum(h * vb[L, :fo], axis=-1) + vb[L + 1, 0]


if __name__ == "__main__":
    key = jax.random.PRNGKey(0)
    kx, kp = jax.random.split(key)

    input_size = 16
    hidden_size = (32, 32, 32)   # 3 hidden layers -> fc1, fc2, fc3, linear
    batch = 8

    x = jax.random.normal(kx, (batch, input_size), jnp.float32)
    params = init_params(kp, input_size, hidden_size)

    out = jax.block_until_ready(nts_mlp_forward(x, params))

    # Tight check against the identical bf16-weight / f32-accumulate path.
    ref_same = reference_forward(x, params)
    # Loose check against full-f32 math (the PyTorch module's semantics).
    ref_f32 = reference_forward(x, params, weights_dtype=jnp.float32)

    assert out.shape == (batch,)
    assert jnp.allclose(out, ref_same, atol=1e-4, rtol=1e-4), (
        float(jnp.max(jnp.abs(out - ref_same))))
    assert jnp.allclose(out, ref_f32, atol=5e-2, rtol=5e-2), (
        float(jnp.max(jnp.abs(out - ref_f32))))

    print("KERNEL_OK")
</pallas_src>

<mosaic_0001>
module attributes {stable_mosaic.version = 11 : i64} {
  func.func @kernel(%arg0: i32, %arg1: memref<128x16xf32, #tpu.memory_space<vmem>>, %arg2: memref<3x128x128xbf16, #tpu.memory_space<vmem>>, %arg3: memref<5x128xf32, #tpu.memory_space<vmem>>, %arg4: memref<1x128xf32, #tpu.memory_space<vmem>>) attributes {dimension_semantics = [#tpu.dimension_semantics<parallel>], iteration_bounds = array<i64: 1>, scalar_prefetch = 0 : i64, scratch_operands = 0 : i64, tpu.core_type = #tpu.core_type<tc>, window_params = [{transform_indices = @transform_0, window_bounds = array<i64: 128, 16>}, {pipeline_mode = #tpu.pipeline_mode<synchronous>, transform_indices = @transform_1, window_bounds = array<i64: 3, 128, 128>}, {pipeline_mode = #tpu.pipeline_mode<synchronous>, transform_indices = @transform_2, window_bounds = array<i64: 5, 128>}, {transform_indices = @transform_3, window_bounds = array<i64: 1, 128>}]} {
    %c0 = arith.constant 0 : index
    %c0_0 = arith.constant 0 : index
    %0 = vector.load %arg1[%c0, %c0_0] : memref<128x16xf32, #tpu.memory_space<vmem>>, vector<128x16xf32>
    %1 = arith.truncf %0 : vector<128x16xf32> to vector<128x16xbf16>
    %c0_1 = arith.constant 0 : index
    %c0_2 = arith.constant 0 : index
    %c0_3 = arith.constant 0 : index
    %2 = vector.load %arg2[%c0_1, %c0_2, %c0_3] : memref<3x128x128xbf16, #tpu.memory_space<vmem>>, vector<1x16x128xbf16>
    %3 = vector.shape_cast %2 : vector<1x16x128xbf16> to vector<16x128xbf16>
    %cst = arith.constant dense<0.000000e+00> : vector<128x128xf32>
    %4 = tpu.matmul %1, %3, %cst {dimension_numbers = #tpu.dot_dimension_numbers<[1], [0], [0], [1], [0, 0, 1, 1], [], []>} : vector<128x16xbf16>, vector<16x128xbf16>, vector<128x128xf32> -> vector<128x128xf32>
    %c0_4 = arith.constant 0 : index
    %c0_5 = arith.constant 0 : index
    %5 = vector.load %arg3[%c0_4, %c0_5] : memref<5x128xf32, #tpu.memory_space<vmem>>, vector<1x128xf32>
    %6 = vector.shape_cast %5 : vector<1x128xf32> to vector<128xf32>
    %7 = vector.shape_cast %6 : vector<128xf32> to vector<1x128xf32>
    %8 = vector.broadcast %7 : vector<1x128xf32> to vector<128x128xf32>
    %9 = arith.addf %4, %8 : vector<128x128xf32>
    %10 = math.tanh %9 : vector<128x128xf32>
    %11 = arith.truncf %10 : vector<128x128xf32> to vector<128x128xbf16>
    %c1 = arith.constant 1 : index
    %c0_6 = arith.constant 0 : index
    %c0_7 = arith.constant 0 : index
    %12 = vector.load %arg2[%c1, %c0_6, %c0_7] : memref<3x128x128xbf16, #tpu.memory_space<vmem>>, vector<1x128x128xbf16>
    %13 = vector.shape_cast %12 : vector<1x128x128xbf16> to vector<128x128xbf16>
    %cst_8 = arith.constant dense<0.000000e+00> : vector<128x128xf32>
    %14 = tpu.matmul %11, %13, %cst_8 {dimension_numbers = #tpu.dot_dimension_numbers<[1], [0], [0], [1], [0, 0, 1, 1], [], []>} : vector<128x128xbf16>, vector<128x128xbf16>, vector<128x128xf32> -> vector<128x128xf32>
    %c1_9 = arith.constant 1 : index
    %c0_10 = arith.constant 0 : index
    %15 = vector.load %arg3[%c1_9, %c0_10] : memref<5x128xf32, #tpu.memory_space<vmem>>, vector<1x128xf32>
    %16 = vector.shape_cast %15 : vector<1x128xf32> to vector<128xf32>
    %17 = vector.shape_cast %16 : vector<128xf32> to vector<1x128xf32>
    %18 = vector.broadcast %17 : vector<1x128xf32> to vector<128x128xf32>
    %19 = arith.addf %14, %18 : vector<128x128xf32>
    %20 = math.tanh %19 : vector<128x128xf32>
    %21 = arith.truncf %20 : vector<128x128xf32> to vector<128x128xbf16>
    %c2 = arith.constant 2 : index
    %c0_11 = arith.constant 0 : index
    %c0_12 = arith.constant 0 : index
    %22 = vector.load %arg2[%c2, %c0_11, %c0_12] : memref<3x128x128xbf16, #tpu.memory_space<vmem>>, vector<1x128x128xbf16>
    %23 = vector.shape_cast %22 : vector<1x128x128xbf16> to vector<128x128xbf16>
    %cst_13 = arith.constant dense<0.000000e+00> : vector<128x128xf32>
    %24 = tpu.matmul %21, %23, %cst_13 {dimension_numbers = #tpu.dot_dimension_numbers<[1], [0], [0], [1], [0, 0, 1, 1], [], []>} : vector<128x128xbf16>, vector<128x128xbf16>, vector<128x128xf32> -> vector<128x128xf32>
    %c2_14 = arith.constant 2 : index
    %c0_15 = arith.constant 0 : index
    %25 = vector.load %arg3[%c2_14, %c0_15] : memref<5x128xf32, #tpu.memory_space<vmem>>, vector<1x128xf32>
    %26 = vector.shape_cast %25 : vector<1x128xf32> to vector<128xf32>
    %27 = vector.shape_cast %26 : vector<128xf32> to vector<1x128xf32>
    %28 = vector.broadcast %27 : vector<1x128xf32> to vector<128x128xf32>
    %29 = arith.addf %24, %28 : vector<128x128xf32>
    %30 = math.tanh %29 : vector<128x128xf32>
    %c3 = arith.constant 3 : index
    %c0_16 = arith.constant 0 : index
    %31 = vector.load %arg3[%c3, %c0_16] : memref<5x128xf32, #tpu.memory_space<vmem>>, vector<1x128xf32>
    %32 = vector.shape_cast %31 : vector<1x128xf32> to vector<128xf32>
    %33 = vector.shape_cast %32 : vector<128xf32> to vector<1x128xf32>
    %c4 = arith.constant 4 : index
    %c0_17 = arith.constant 0 : index
    %34 = vector.load %arg3[%c4, %c0_17] : memref<5x128xf32, #tpu.memory_space<vmem>>, vector<1x1xf32>
    %35 = vector.extract %34[0, 0] : f32 from vector<1x1xf32>
    %36 = vector.broadcast %33 : vector<1x128xf32> to vector<128x128xf32>
    %37 = arith.mulf %30, %36 : vector<128x128xf32>
    %cst_18 = arith.constant dense<0.000000e+00> : vector<128xf32>
    %38 = vector.multi_reduction <add>, %37, %cst_18 [1] : vector<128x128xf32> to vector<128xf32>
    %39 = vector.broadcast %35 : f32 to vector<128xf32>
    %40 = arith.addf %38, %39 : vector<128xf32>
    %41 = vector.shape_cast %40 : vector<128xf32> to vector<1x128xf32>
    %c0_19 = arith.constant 0 : index
    %c0_20 = arith.constant 0 : index
    %42 = vector.load %arg4[%c0_19, %c0_20] : memref<1x128xf32, #tpu.memory_space<vmem>>, vector<1x128xf32>
    tpu.vector_store %arg4[%c0_19, %c0_20], %41 {strides = array<i32>} : memref<1x128xf32, #tpu.memory_space<vmem>>, vector<1x128xf32>,
    return
  }
  func.func @transform_0(%arg0: i32) -> (i32, i32) {
    %c0_i32 = arith.constant 0 : i32
    %c0_i32_0 = arith.constant 0 : i32
    return %arg0, %c0_i32 : i32, i32
  }
  func.func @transform_1(%arg0: i32) -> (i32, i32, i32) {
    %c0_i32 = arith.constant 0 : i32
    %c0_i32_0 = arith.constant 0 : i32
    %c0_i32_1 = arith.constant 0 : i32
    %c0_i32_2 = arith.constant 0 : i32
    return %c0_i32, %c0_i32_0, %c0_i32_1 : i32, i32, i32
  }
  func.func @transform_2(%arg0: i32) -> (i32, i32) {
    %c0_i32 = arith.constant 0 : i32
    %c0_i32_0 = arith.constant 0 : i32
    %c0_i32_1 = arith.constant 0 : i32
    return %c0_i32, %c0_i32_0 : i32, i32
  }
  func.func @transform_3(%arg0: i32) -> (i32, i32) {
    %c0_i32 = arith.constant 0 : i32
    %c0_i32_0 = arith.constant 0 : i32
    return %c0_i32, %arg0 : i32, i32
  }
}

</mosaic_0001>

<llo_original>
// kernel: tpu_custom_call.1
$region0: #{tpu_custom_call.1}
  #allocation0 [shape = 'u32[]', space=smem, size = 0x4, offset = 0x4, fixed_abs, tag = 'smem constant byte address 0x4 - core index']
  #allocation1 [shape = 'u32[144,128]{1,0:T(1,128)}', space=vmem, size = 0x12000, scoped, tag = 'internal scratch']
  %s0 = inlined_call_operand.vmem [shape: f32[128,16], index: 0, kind: input, shape index: {}]
  %s1 = inlined_call_operand.hbm [shape: bf16[3,128,128], index: 1, kind: input, shape index: {}]
  %s2 = inlined_call_operand.vmem [shape: f32[5,128], index: 2, kind: input, shape index: {}]
  %s3 = inlined_call_operand.hbm [shape: f32[1,128], index: 3, kind: output, shape index: {}]
  %s4 = sld [smem:[#allocation0]]
  $region26: #{tpu_custom_call.1} parent=0
    _
  %s6 = ssub.s32 1, %s4
  %s7 = scalar_select 0, %s6, %s4
  $region1: #{tpu_custom_call.1} parent=0
    #allocation2 [shape = 'u8[98304]{0}', space=vmem, size = 0x18000, scoped, tag = 'input window, operand 1, single buffered']
    #allocation3 [shape = 's32[1]{0}', space=sflag, size = 0x4, scoped, tag = 'scoped memory for tpu_custom_call.1']
    #allocation4 [shape = 's32[1]{0}', space=sflag, size = 0x4, scoped, tag = 'scoped memory for tpu_custom_call.1']
    #allocation5 [shape = 'u8[512]{0}', space=vmem, size = 0x400, scoped, tag = 'output window, operand 0, single buffered']
    %8 = vsyncpa [#allocation3], 0
    %9 = vsyncpa [#allocation4], 0
    // Predicated region
    $region2: #{tpu_custom_call.1} parent=1 // pred_check
      _
    $region3: #{tpu_custom_call.1} parent=1 // pred_check_branch
      %11 = sbr.rel (0) target = $region5
    $region4: #{tpu_custom_call.1} parent=1 // pred_region
      _
    $region5: #{tpu_custom_call.1} parent=1 // pred_fallthru
      _
    // Predicated region
    $region6: #{tpu_custom_call.1} parent=1 // pred_check
      _
    $region7: #{tpu_custom_call.1} parent=1 // pred_check_branch
      %13 = sbr.rel (0) target = $region9
    $region8: #{tpu_custom_call.1} parent=1 // pred_region
      %s15 = ssub.s32 3072, 3072
      %16 = vsyncadd [#allocation3], %s15
      %s17 = sshll.u32 [#allocation2], 4
      %s18 = int_to_ptr.vmem [resolvable:$true] %s17
      %23 = dma.hbm_to_vmem [thread:$0]  %s1, 3072, %s18, [#allocation3], 64, 64, 4
    $region9: #{tpu_custom_call.1} parent=1 // pred_fallthru
      _
    // Predicated region
    $region10: #{tpu_custom_call.1} parent=1 // pred_check
      _
    $region11: #{tpu_custom_call.1} parent=1 // pred_check_branch
      %25 = sbr.rel (0) target = $region13
    $region12: #{tpu_custom_call.1} parent=1 // pred_region
      _
    $region13: #{tpu_custom_call.1} parent=1 // pred_fallthru
      _
    // Predicated region
    $region14: #{tpu_custom_call.1} parent=1 // pred_check
      _
    $region15: #{tpu_custom_call.1} parent=1 // pred_check_branch
      %27 = sbr.rel (0) target = $region17
    $region16: #{tpu_custom_call.1} parent=1 // pred_region
      %28 = dma.done [#allocation3], 3072
    $region17: #{tpu_custom_call.1} parent=1 // pred_fallthru
      _
    %v30 = vld [vmem:[%s0] sm:$0xff]
    %v31 = vld [vmem:[%s0 + $0x8] sm:$0xff]
    %v32 = vld [vmem:[%s0 + $0x10] sm:$0xff]
    %v33 = vld [vmem:[%s0 + $0x18] sm:$0xff]
    %v34 = vld [vmem:[%s0 + $0x20] sm:$0xff]
    %v35 = vld [vmem:[%s0 + $0x28] sm:$0xff]
    %v36 = vld [vmem:[%s0 + $0x30] sm:$0xff]
    %v37 = vld [vmem:[%s0 + $0x38] sm:$0xff]
    %v38 = vld [vmem:[%s0 + $0x40] sm:$0xff]
    %v39 = vld [vmem:[%s0 + $0x48] sm:$0xff]
    %v40 = vld [vmem:[%s0 + $0x50] sm:$0xff]
    %v41 = vld [vmem:[%s0 + $0x58] sm:$0xff]
    %v42 = vld [vmem:[%s0 + $0x60] sm:$0xff]
    %v43 = vld [vmem:[%s0 + $0x68] sm:$0xff]
    %v44 = vld [vmem:[%s0 + $0x70] sm:$0xff]
    %v45 = vld [vmem:[%s0 + $0x78] sm:$0xff]
    %v46 = vpack.c.bf16 %v31, %v30
    %v47 = vpack.c.bf16 %v33, %v32
    %v48 = vpack.c.bf16 %v35, %v34
    %v49 = vpack.c.bf16 %v37, %v36
    %v50 = vpack.c.bf16 %v39, %v38
    %v51 = vpack.c.bf16 %v41, %v40
    %v52 = vpack.c.bf16 %v43, %v42
    %v53 = vpack.c.bf16 %v45, %v44
    %v54 = vld [vmem:[#allocation2] sm:$0xf]
    %v55 = vld [vmem:[#allocation2 + $0x4] sm:$0xf]
    %v56 = vld [vmem:[%s2] sm:$0x1]
    %v57 = vlaneseq
    %v58 = vshrl.u32 %v57, 7
    %v59 = vsub.s32 0, %v58
    %v60 = vrot.slane %v56, %v59
    %v63 = vunpack.c.l.b16 %v54
    %v64 = vunpack.c.l.b16 %v55
    %v65 = vpack.c.b16 %v64, %v63
    %vm67 = vcmask 130048
    %v69 = vsel %vm67, %v46, 0
    %v72 = vsel %vm67, %v47, 0
    %v75 = vsel %vm67, %v48, 0
    %v78 = vsel %vm67, %v49, 0
    %v81 = vsel %vm67, %v50, 0
    %v84 = vsel %vm67, %v51, 0
    %v87 = vsel %vm67, %v52, 0
    %v90 = vsel %vm67, %v53, 0
    %92 = vmatprep.subr.bf16.mxu0 0
    %93 = vmatpush1.bf16.msra.mxu0 %v65
    %94 = vmatprep.subr.bf16.mxu0 0
    %95 = vmatpush1.bf16.msra.mxu0 0
    %96 = vmatprep.subr.bf16.mxu0 0
    %97 = vmatpush1.bf16.msra.mxu0 0
    %98 = vmatprep.subr.bf16.mxu0 0
    %99 = vmatpush1.bf16.msra.mxu0 0
    %100 = vmatprep.subr.bf16.mxu0 0
    %101 = vmatpush1.bf16.msra.mxu0 0
    %102 = vmatprep.subr.bf16.mxu0 0
    %103 = vmatpush1.bf16.msra.mxu0 0
    %104 = vmatprep.subr.bf16.mxu0 0
    %105 = vmatpush1.bf16.msra.mxu0 0
    %106 = vmatprep.subr.bf16.mxu0 0
    %107 = vmatpush1.bf16.msra.mxu0 0
    %108 = vmatprep.subr.bf16.mxu0 0
    %109 = vmatpush1.bf16.msra.mxu0 0
    %110 = vmatprep.subr.bf16.mxu0 0
    %111 = vmatpush1.bf16.msra.mxu0 0
    %112 = vmatprep.subr.bf16.mxu0 0
    %113 = vmatpush1.bf16.msra.mxu0 0
    %114 = vmatprep.subr.bf16.mxu0 0
    %115 = vmatpush1.bf16.msra.mxu0 0
    %116 = vmatprep.subr.bf16.mxu0 0
    %117 = vmatpush1.bf16.msra.mxu0 0
    %118 = vmatprep.subr.bf16.mxu0 0
    %119 = vmatpush1.bf16.msra.mxu0 0
    %120 = vmatprep.subr.bf16.mxu0 0
    %121 = vmatpush1.bf16.msra.mxu0 0
    %122 = vmatprep.subr.bf16.mxu0 0
    %123 = vmatpush1.bf16.msra.mxu0 0
    %124 = vmatprep.mubr.bf16.mxu0 0
    %125 = vmatmul.mubr.bf16.gmra.mrb[0].mxu0 %v69
    %v126 = vpop.f32.mrb[0].mxu0
    %v127 = vadd.f32 %v60, %v126
    %v128 = vpop.f32.mrb[0].mxu0
    %v129 = vpop.f32.mrb[0].mxu0
    %v130 = vadd.f32 %v60, %v129
    %v131 = vpop.f32.mrb[0].mxu0
    %132 = vmatprep.mubr.bf16.mxu0 0
    %133 = vmatmul.mubr.bf16.gmra.mrb[0].mxu0 %v72
    %v134 = vpop.f32.mrb[0].mxu0
    %v135 = vadd.f32 %v60, %v134
    %v136 = vpop.f32.mrb[0].mxu0
    %v137 = vpop.f32.mrb[0].mxu0
    %v138 = vadd.f32 %v60, %v137
    %v139 = vpop.f32.mrb[0].mxu0
    %140 = vmatprep.mubr.bf16.mxu0 0
    %141 = vmatmul.mubr.bf16.gmra.mrb[0].mxu0 %v75
    %v142 = vpop.f32.mrb[0].mxu0
    %v143 = vadd.f32 %v60, %v142
    %v144 = vpop.f32.mrb[0].mxu0
    %v145 = vpop.f32.mrb[0].mxu0
    %v146 = vadd.f32 %v60, %v145
    %v147 = vpop.f32.mrb[0].mxu0
    %148 = vmatprep.mubr.bf16.mxu0 0
    %149 = vmatmul.mubr.bf16.gmra.mrb[0].mxu0 %v78
    %v150 = vpop.f32.mrb[0].mxu0
    %v151 = vadd.f32 %v60, %v150
    %v152 = vpop.f32.mrb[0].mxu0
    %v153 = vpop.f32.mrb[0].mxu0
    %v154 = vadd.f32 %v60, %v153
    %v155 = vpop.f32.mrb[0].mxu0
    %156 = vmatprep.mubr.bf16.mxu0 0
    %157 = vmatmul.mubr.bf16.gmra.mrb[0].mxu0 %v81
    %v158 = vpop.f32.mrb[0].mxu0
    %v159 = vadd.f32 %v60, %v158
    %v160 = vpop.f32.mrb[0].mxu0
    %v161 = vpop.f32.mrb[0].mxu0
    %v162 = vadd.f32 %v60, %v161
    %v163 = vpop.f32.mrb[0].mxu0
    %164 = vmatprep.mubr.bf16.mxu0 0
    %165 = vmatmul.mubr.bf16.gmra.mrb[0].mxu0 %v84
    %v166 = vpop.f32.mrb[0].mxu0
    %v167 = vadd.f32 %v60, %v166
    %v168 = vpop.f32.mrb[0].mxu0
    %v169 = vpop.f32.mrb[0].mxu0
    %v170 = vadd.f32 %v60, %v169
    %v171 = vpop.f32.mrb[0].mxu0
    %172 = vmatprep.mubr.bf16.mxu0 0
    %173 = vmatmul.mubr.bf16.gmra.mrb[0].mxu0 %v87
    %v174 = vpop.f32.mrb[0].mxu0
    %v175 = vadd.f32 %v60, %v174
    %v176 = vpop.f32.mrb[0].mxu0
    %v177 = vpop.f32.mrb[0].mxu0
    %v178 = vadd.f32 %v60, %v177
    %v179 = vpop.f32.mrb[0].mxu0
    %180 = vmatprep.mubr.bf16.mxu0 0
    %181 = vmatmul.mubr.bf16.gmra.mrb[0].mxu0 %v90
    %v182 = vpop.f32.mrb[0].mxu0
    %v183 = vadd.f32 %v60, %v182
    %v184 = vpop.f32.mrb[0].mxu0
    %v185 = vpop.f32.mrb[0].mxu0
    %v186 = vadd.f32 %v60, %v185
    %v187 = vpop.f32.mrb[0].mxu0
    %188 = vdwg.mxu0
    %v189 = vtanh.pop %v127
    %v190 = vtanh.pop %v130
    %v191 = vtanh.pop %v135
    %v192 = vtanh.pop %v138
    %v193 = vtanh.pop %v143
    %v194 = vtanh.pop %v146
    %v195 = vtanh.pop %v151
    %v196 = vtanh.pop %v154
    %v197 = vtanh.pop %v159
    %v198 = vtanh.pop %v162
    %v199 = vtanh.pop %v167
    %v200 = vtanh.pop %v170
    %v201 = vtanh.pop %v175
    %v202 = vtanh.pop %v178
    %v203 = vtanh.pop %v183
    %v204 = vtanh.pop %v186
    %v205 = vpack.c.bf16 %v190, %v189
    %v206 = vpack.c.bf16 %v192, %v191
    %v207 = vpack.c.bf16 %v194, %v193
    %v208 = vpack.c.bf16 %v196, %v195
    %v209 = vpack.c.bf16 %v198, %v197
    %v210 = vpack.c.bf16 %v200, %v199
    %v211 = vpack.c.bf16 %v202, %v201
    %v212 = vpack.c.bf16 %v204, %v203
    %s213 = scalar_lea.vmem [#allocation2], 64
    %v214 = vld [vmem:[%s213] sm:$0xf]
    %v215 = vld [vmem:[%s213 + $0x4] sm:$0xf]
    %v216 = vld [vmem:[%s213 + $0x8] sm:$0xf]
    %v217 = vld [vmem:[%s213 + $0xc] sm:$0xf]
    %v218 = vld [vmem:[%s213 + $0x10] sm:$0xf]
    %v219 = vld [vmem:[%s213 + $0x14] sm:$0xf]
    %v220 = vld [vmem:[%s213 + $0x18] sm:$0xf]
    %v221 = vld [vmem:[%s213 + $0x1c] sm:$0xf]
    %v222 = vld [vmem:[%s213 + $0x20] sm:$0xf]
    %v223 = vld [vmem:[%s213 + $0x24] sm:$0xf]
    %v224 = vld [vmem:[%s213 + $0x28] sm:$0xf]
    %v225 = vld [vmem:[%s213 + $0x2c] sm:$0xf]
    %v226 = vld [vmem:[%s213 + $0x30] sm:$0xf]
    %v227 = vld [vmem:[%s213 + $0x34] sm:$0xf]
    %v228 = vld [vmem:[%s213 + $0x38] sm:$0xf]
    %v229 = vld [vmem:[%s213 + $0x3c] sm:$0xf]
    %v230 = vld [vmem:[%s2 + $0x1] sm:$0x1]
    %v231 = vlaneseq
    %v232 = vshrl.u32 %v231, 7
    %v233 = vsub.s32 0, %v232
    %v234 = vrot.slane %v230, %v233
    %v251 = vunpack.c.l.b16 %v214
    %v252 = vunpack.c.l.b16 %v215
    %v253 = vunpack.c.l.b16 %v216
    %v254 = vunpack.c.l.b16 %v217
    %v255 = vunpack.c.l.b16 %v218
    %v256 = vunpack.c.l.b16 %v219
    %v257 = vunpack.c.l.b16 %v220
    %v258 = vunpack.c.l.b16 %v221
    %v259 = vunpack.c.l.b16 %v222
    %v260 = vunpack.c.l.b16 %v223
    %v261 = vunpack.c.l.b16 %v224
    %v262 = vunpack.c.l.b16 %v225
    %v263 = vunpack.c.l.b16 %v226
    %v264 = vunpack.c.l.b16 %v227
    %v265 = vunpack.c.l.b16 %v228
    %v266 = vunpack.c.l.b16 %v229
    %v267 = vpack.c.b16 %v252, %v251
    %v268 = vpack.c.b16 %v254, %v253
    %v269 = vpack.c.b16 %v256, %v255
    %v270 = vpack.c.b16 %v258, %v257
    %v271 = vpack.c.b16 %v260, %v259
    %v272 = vpack.c.b16 %v262, %v261
    %v273 = vpack.c.b16 %v264, %v263
    %v274 = vpack.c.b16 %v266, %v265
    %283 = vmatprep.subr.bf16.mxu0 0
    %284 = vmatpush1.bf16.msra.mxu0 %v267
    %285 = vmatprep.subr.bf16.mxu0 0
    %286 = vmatpush1.bf16.msra.mxu0 %v268
    %287 = vmatprep.subr.bf16.mxu0 0
    %288 = vmatpush1.bf16.msra.mxu0 %v269
    %289 = vmatprep.subr.bf16.mxu0 0
    %290 = vmatpush1.bf16.msra.mxu0 %v270
    %291 = vmatprep.subr.bf16.mxu0 0
    %292 = vmatpush1.bf16.msra.mxu0 %v271
    %293 = vmatprep.subr.bf16.mxu0 0
    %294 = vmatpush1.bf16.msra.mxu0 %v272
    %295 = vmatprep.subr.bf16.mxu0 0
    %296 = vmatpush1.bf16.msra.mxu0 %v273
    %297 = vmatprep.subr.bf16.mxu0 0
    %298 = vmatpush1.bf16.msra.mxu0 %v274
    %299 = vmatprep.subr.bf16.mxu0 0
    %300 = vmatpush1.bf16.msra.mxu0 0
    %301 = vmatprep.subr.bf16.mxu0 0
    %302 = vmatpush1.bf16.msra.mxu0 0
    %303 = vmatprep.subr.bf16.mxu0 0
    %304 = vmatpush1.bf16.msra.mxu0 0
    %305 = vmatprep.subr.bf16.mxu0 0
    %306 = vmatpush1.bf16.msra.mxu0 0
    %307 = vmatprep.subr.bf16.mxu0 0
    %308 = vmatpush1.bf16.msra.mxu0 0
    %309 = vmatprep.subr.bf16.mxu0 0
    %310 = vmatpush1.bf16.msra.mxu0 0
    %311 = vmatprep.subr.bf16.mxu0 0
    %312 = vmatpush1.bf16.msra.mxu0 0
    %313 = vmatprep.subr.bf16.mxu0 0
    %314 = vmatpush1.bf16.msra.mxu0 0
    %315 = vmatprep.mubr.bf16.mxu0 0
    %316 = vmatmul.mubr.bf16.gmra.mrb[0].mxu0 %v205
    %v317 = vpop.f32.mrb[0].mxu0
    %v318 = vadd.f32 %v234, %v317
    %v319 = vpop.f32.mrb[0].mxu0
    %v320 = vpop.f32.mrb[0].mxu0
    %v321 = vadd.f32 %v234, %v320
    %v322 = vpop.f32.mrb[0].mxu0
    %323 = vmatprep.mubr.bf16.mxu0 0
    %324 = vmatmul.mubr.bf16.gmra.mrb[0].mxu0 %v206
    %v325 = vpop.f32.mrb[0].mxu0
    %v326 = vadd.f32 %v234, %v325
    %v327 = vpop.f32.mrb[0].mxu0
    %v328 = vpop.f32.mrb[0].mxu0
    %v329 = vadd.f32 %v234, %v328
    %v330 = vpop.f32.mrb[0].mxu0
    %331 = vmatprep.mubr.bf16.mxu0 0
    %332 = vmatmul.mubr.bf16.gmra.mrb[0].mxu0 %v207
    %v333 = vpop.f32.mrb[0].mxu0
    %v334 = vadd.f32 %v234, %v333
    %v335 = vpop.f32.mrb[0].mxu0
    %v336 = vpop.f32.mrb[0].mxu0
    %v337 = vadd.f32 %v234, %v336
    %v338 = vpop.f32.mrb[0].mxu0
    %339 = vmatprep.mubr.bf16.mxu0 0
    %340 = vmatmul.mubr.bf16.gmra.mrb[0].mxu0 %v208
    %v341 = vpop.f32.mrb[0].mxu0
    %v342 = vadd.f32 %v234, %v341
    %v343 = vpop.f32.mrb[0].mxu0
    %v344 = vpop.f32.mrb[0].mxu0
    %v345 = vadd.f32 %v234, %v344
    %v346 = vpop.f32.mrb[0].mxu0
    %347 = vmatprep.mubr.bf16.mxu0 0
    %348 = vmatmul.mubr.bf16.gmra.mrb[0].mxu0 %v209
    %v349 = vpop.f32.mrb[0].mxu0
    %v350 = vadd.f32 %v234, %v349
    %v351 = vpop.f32.mrb[0].mxu0
    %v352 = vpop.f32.mrb[0].mxu0
    %v353 = vadd.f32 %v234, %v352
    %v354 = vpop.f32.mrb[0].mxu0
    %355 = vmatprep.mubr.bf16.mxu0 0
    %356 = vmatmul.mubr.bf16.gmra.mrb[0].mxu0 %v210
    %v357 = vpop.f32.mrb[0].mxu0
    %v358 = vadd.f32 %v234, %v357
    %v359 = vpop.f32.mrb[0].mxu0
    %v360 = vpop.f32.mrb[0].mxu0
    %v361 = vadd.f32 %v234, %v360
    %v362 = vpop.f32.mrb[0].mxu0
    %363 = vmatprep.mubr.bf16.mxu0 0
    %364 = vmatmul.mubr.bf16.gmra.mrb[0].mxu0 %v211
    %v365 = vpop.f32.mrb[0].mxu0
    %v366 = vadd.f32 %v234, %v365
    %v367 = vpop.f32.mrb[0].mxu0
    %v368 = vpop.f32.mrb[0].mxu0
    %v369 = vadd.f32 %v234, %v368
    %v370 = vpop.f32.mrb[0].mxu0
    %371 = vmatprep.mubr.bf16.mxu0 0
    %372 = vmatmul.mubr.bf16.gmra.mrb[0].mxu0 %v212
    %v373 = vpop.f32.mrb[0].mxu0
    %v374 = vadd.f32 %v234, %v373
    %v375 = vpop.f32.mrb[0].mxu0
    %v376 = vpop.f32.mrb[0].mxu0
    %v377 = vadd.f32 %v234, %v376
    %v378 = vpop.f32.mrb[0].mxu0
    %379 = vdwg.mxu0
    %v380 = vtanh.pop %v318
    %v381 = vtanh.pop %v321
    %v382 = vtanh.pop %v326
    %v383 = vtanh.pop %v329
    %v384 = vtanh.pop %v334
    %v385 = vtanh.pop %v337
    %v386 = vtanh.pop %v342
    %v387 = vtanh.pop %v345
    %v388 = vtanh.pop %v350
    %v389 = vtanh.pop %v353
    %v390 = vtanh.pop %v358
    %v391 = vtanh.pop %v361
    %v392 = vtanh.pop %v366
    %v393 = vtanh.pop %v369
    %v394 = vtanh.pop %v374
    %v395 = vtanh.pop %v377
    %v396 = vpack.c.bf16 %v381, %v380
    %v397 = vpack.c.bf16 %v383, %v382
    %v398 = vpack.c.bf16 %v385, %v384
    %v399 = vpack.c.bf16 %v387, %v386
    %v400 = vpack.c.bf16 %v389, %v388
    %v401 = vpack.c.bf16 %v391, %v390
    %v402 = vpack.c.bf16 %v393, %v392
    %v403 = vpack.c.bf16 %v395, %v394
    %s404 = scalar_lea.vmem [#allocation2], 128
    %v405 = vld [vmem:[%s404] sm:$0xf]
    %v406 = vld [vmem:[%s404 + $0x4] sm:$0xf]
    %v407 = vld [vmem:[%s404 + $0x8] sm:$0xf]
    %v408 = vld [vmem:[%s404 + $0xc] sm:$0xf]
    %v409 = vld [vmem:[%s404 + $0x10] sm:$0xf]
    %v410 = vld [vmem:[%s404 + $0x14] sm:$0xf]
    %v411 = vld [vmem:[%s404 + $0x18] sm:$0xf]
    %v412 = vld [vmem:[%s404 + $0x1c] sm:$0xf]
    %v413 = vld [vmem:[%s404 + $0x20] sm:$0xf]
    %v414 = vld [vmem:[%s404 + $0x24] sm:$0xf]
    %v415 = vld [vmem:[%s404 + $0x28] sm:$0xf]
    %v416 = vld [vmem:[%s404 + $0x2c] sm:$0xf]
    %v417 = vld [vmem:[%s404 + $0x30] sm:$0xf]
    %v418 = vld [vmem:[%s404 + $0x34] sm:$0xf]
    %v419 = vld [vmem:[%s404 + $0x38] sm:$0xf]
    %v420 = vld [vmem:[%s404 + $0x3c] sm:$0xf]
    %v421 = vld [vmem:[%s2 + $0x2] sm:$0x1]
    %v422 = vlaneseq
    %v423 = vshrl.u32 %v422, 7
    %v424 = vsub.s32 0, %v423
    %v425 = vrot.slane %v421, %v424
    %v442 = vunpack.c.l.b16 %v405
    %v443 = vunpack.c.l.b16 %v406
    %v444 = vunpack.c.l.b16 %v407
    %v445 = vunpack.c.l.b16 %v408
    %v446 = vunpack.c.l.b16 %v409
    %v447 = vunpack.c.l.b16 %v410
    %v448 = vunpack.c.l.b16 %v411
    %v449 = vunpack.c.l.b16 %v412
    %v450 = vunpack.c.l.b16 %v413
    %v451 = vunpack.c.l.b16 %v414
    %v452 = vunpack.c.l.b16 %v415
    %v453 = vunpack.c.l.b16 %v416
    %v454 = vunpack.c.l.b16 %v417
    %v455 = vunpack.c.l.b16 %v418
    %v456 = vunpack.c.l.b16 %v419
    %v457 = vunpack.c.l.b16 %v420
    %v458 = vpack.c.b16 %v443, %v442
    %v459 = vpack.c.b16 %v445, %v444
    %v460 = vpack.c.b16 %v447, %v446
    %v461 = vpack.c.b16 %v449, %v448
    %v462 = vpack.c.b16 %v451, %v450
    %v463 = vpack.c.b16 %v453, %v452
    %v464 = vpack.c.b16 %v455, %v454
    %v465 = vpack.c.b16 %v457, %v456
    %474 = vmatprep.subr.bf16.mxu0 0
    %475 = vmatpush1.bf16.msra.mxu0 %v458
    %476 = vmatprep.subr.bf16.mxu0 0
    %477 = vmatpush1.bf16.msra.mxu0 %v459
    %478 = vmatprep.subr.bf16.mxu0 0
    %479 = vmatpush1.bf16.msra.mxu0 %v460
    %480 = vmatprep.subr.bf16.mxu0 0
    %481 = vmatpush1.bf16.msra.mxu0 %v461
    %482 = vmatprep.subr.bf16.mxu0 0
    %483 = vmatpush1.bf16.msra.mxu0 %v462
    %484 = vmatprep.subr.bf16.mxu0 0
    %485 = vmatpush1.bf16.msra.mxu0 %v463
    %486 = vmatprep.subr.bf16.mxu0 0
    %487 = vmatpush1.bf16.msra.mxu0 %v464
    %488 = vmatprep.subr.bf16.mxu0 0
    %489 = vmatpush1.bf16.msra.mxu0 %v465
    %490 = vmatprep.subr.bf16.mxu0 0
    %491 = vmatpush1.bf16.msra.mxu0 0
    %492 = vmatprep.subr.bf16.mxu0 0
    %493 = vmatpush1.bf16.msra.mxu0 0
    %494 = vmatprep.subr.bf16.mxu0 0
    %495 = vmatpush1.bf16.msra.mxu0 0
    %496 = vmatprep.subr.bf16.mxu0 0
    %497 = vmatpush1.bf16.msra.mxu0 0
    %498 = vmatprep.subr.bf16.mxu0 0
    %499 = vmatpush1.bf16.msra.mxu0 0
    %500 = vmatprep.subr.bf16.mxu0 0
    %501 = vmatpush1.bf16.msra.mxu0 0
    %502 = vmatprep.subr.bf16.mxu0 0
    %503 = vmatpush1.bf16.msra.mxu0 0
    %504 = vmatprep.subr.bf16.mxu0 0
    %505 = vmatpush1.bf16.msra.mxu0 0
    %506 = vmatprep.mubr.bf16.mxu0 0
    %507 = vmatmul.mubr.bf16.gmra.mrb[0].mxu0 %v396
    %v508 = vpop.f32.mrb[0].mxu0
    %v509 = vadd.f32 %v425, %v508
    %v510 = vpop.f32.mrb[0].mxu0
    %v511 = vpop.f32.mrb[0].mxu0
    %v512 = vadd.f32 %v425, %v511
    %v513 = vpop.f32.mrb[0].mxu0
    %514 = vmatprep.mubr.bf16.mxu0 0
    %515 = vmatmul.mubr.bf16.gmra.mrb[0].mxu0 %v397
    %v516 = vpop.f32.mrb[0].mxu0
    %v517 = vadd.f32 %v425, %v516
    %v518 = vpop.f32.mrb[0].mxu0
    %v519 = vpop.f32.mrb[0].mxu0
    %v520 = vadd.f32 %v425, %v519
    %v521 = vpop.f32.mrb[0].mxu0
    %522 = vmatprep.mubr.bf16.mxu0 0
    %523 = vmatmul.mubr.bf16.gmra.mrb[0].mxu0 %v398
    %v524 = vpop.f32.mrb[0].mxu0
    %v525 = vadd.f32 %v425, %v524
    %v526 = vpop.f32.mrb[0].mxu0
    %v527 = vpop.f32.mrb[0].mxu0
    %v528 = vadd.f32 %v425, %v527
    %v529 = vpop.f32.mrb[0].mxu0
    %530 = vmatprep.mubr.bf16.mxu0 0
    %531 = vmatmul.mubr.bf16.gmra.mrb[0].mxu0 %v399
    %v532 = vpop.f32.mrb[0].mxu0
    %v533 = vadd.f32 %v425, %v532
    %v534 = vpop.f32.mrb[0].mxu0
    %v535 = vpop.f32.mrb[0].mxu0
    %v536 = vadd.f32 %v425, %v535
    %v537 = vpop.f32.mrb[0].mxu0
    %538 = vmatprep.mubr.bf16.mxu0 0
    %539 = vmatmul.mubr.bf16.gmra.mrb[0].mxu0 %v400
    %v540 = vpop.f32.mrb[0].mxu0
    %v541 = vadd.f32 %v425, %v540
    %v542 = vpop.f32.mrb[0].mxu0
    %v543 = vpop.f32.mrb[0].mxu0
    %v544 = vadd.f32 %v425, %v543
    %v545 = vpop.f32.mrb[0].mxu0
    %546 = vmatprep.mubr.bf16.mxu0 0
    %547 = vmatmul.mubr.bf16.gmra.mrb[0].mxu0 %v401
    %v548 = vpop.f32.mrb[0].mxu0
    %v549 = vadd.f32 %v425, %v548
    %v550 = vpop.f32.mrb[0].mxu0
    %v551 = vpop.f32.mrb[0].mxu0
    %v552 = vadd.f32 %v425, %v551
    %v553 = vpop.f32.mrb[0].mxu0
    %554 = vmatprep.mubr.bf16.mxu0 0
    %555 = vmatmul.mubr.bf16.gmra.mrb[0].mxu0 %v402
    %v556 = vpop.f32.mrb[0].mxu0
    %v557 = vadd.f32 %v425, %v556
    %v558 = vpop.f32.mrb[0].mxu0
    %v559 = vpop.f32.mrb[0].mxu0
    %v560 = vadd.f32 %v425, %v559
    %v561 = vpop.f32.mrb[0].mxu0
    %562 = vmatprep.mubr.bf16.mxu0 0
    %563 = vmatmul.mubr.bf16.gmra.mrb[0].mxu0 %v403
    %v564 = vpop.f32.mrb[0].mxu0
    %v565 = vadd.f32 %v425, %v564
    %v566 = vpop.f32.mrb[0].mxu0
    %v567 = vpop.f32.mrb[0].mxu0
    %v568 = vadd.f32 %v425, %v567
    %v569 = vpop.f32.mrb[0].mxu0
    %570 = vdwg.mxu0
    %v571 = vtanh.pop %v509
    %v572 = vtanh.pop %v512
    %v573 = vtanh.pop %v517
    %v574 = vtanh.pop %v520
    %v575 = vtanh.pop %v525
    %v576 = vtanh.pop %v528
    %v577 = vtanh.pop %v533
    %v578 = vtanh.pop %v536
    %v579 = vtanh.pop %v541
    %v580 = vtanh.pop %v544
    %v581 = vtanh.pop %v549
    %v582 = vtanh.pop %v552
    %v583 = vtanh.pop %v557
    %v584 = vtanh.pop %v560
    %v585 = vtanh.pop %v565
    %v586 = vtanh.pop %v568
    %v587 = vld [vmem:[%s2 + $0x3] sm:$0x1]
    %v588 = vld [vmem:[%s2 + $0x4] sm:$0x1]
    %s589 = vtos %v588
    %v590 = vlaneseq
    %v591 = vshrl.u32 %v590, 7
    %v592 = vsub.s32 0, %v591
    %v593 = vrot.slane %v587, %v592
    %v594 = vmul.f32 %v571, %v593
    %v595 = vmul.f32 %v572, %v593
    %v596 = vmul.f32 %v573, %v593
    %v597 = vmul.f32 %v574, %v593
    %v598 = vmul.f32 %v575, %v593
    %v599 = vmul.f32 %v576, %v593
    %v600 = vmul.f32 %v577, %v593
    %v601 = vmul.f32 %v578, %v593
    %v602 = vmul.f32 %v579, %v593
    %v603 = vmul.f32 %v580, %v593
    %v604 = vmul.f32 %v581, %v593
    %v605 = vmul.f32 %v582, %v593
    %v606 = vmul.f32 %v583, %v593
    %v607 = vmul.f32 %v584, %v593
    %v608 = vmul.f32 %v585, %v593
    %v609 = vmul.f32 %v586, %v593
    %610 = vadd.xlane.f32.xlu0 %v594
    %v611 = vpop.xlane.xlu0 %610
    %612 = vadd.xlane.f32.xlu0 %v595
    %v613 = vpop.xlane.xlu0 %612
    %614 = vadd.xlane.f32.xlu0 %v596
    %v615 = vpop.xlane.xlu0 %614
    %616 = vadd.xlane.f32.xlu0 %v597
    %v617 = vpop.xlane.xlu0 %616
    %618 = vadd.xlane.f32.xlu0 %v598
    %v619 = vpop.xlane.xlu0 %618
    %620 = vadd.xlane.f32.xlu0 %v599
    %v621 = vpop.xlane.xlu0 %620
    %622 = vadd.xlane.f32.xlu0 %v600
    %v623 = vpop.xlane.xlu0 %622
    %624 = vadd.xlane.f32.xlu0 %v601
    %v625 = vpop.xlane.xlu0 %624
    %626 = vadd.xlane.f32.xlu0 %v602
    %v627 = vpop.xlane.xlu0 %626
    %628 = vadd.xlane.f32.xlu0 %v603
    %v629 = vpop.xlane.xlu0 %628
    %630 = vadd.xlane.f32.xlu0 %v604
    %v631 = vpop.xlane.xlu0 %630
    %632 = vadd.xlane.f32.xlu0 %v605
    %v633 = vpop.xlane.xlu0 %632
    %634 = vadd.xlane.f32.xlu0 %v606
    %v635 = vpop.xlane.xlu0 %634
    %636 = vadd.xlane.f32.xlu0 %v607
    %v637 = vpop.xlane.xlu0 %636
    %638 = vadd.xlane.f32.xlu0 %v608
    %v639 = vpop.xlane.xlu0 %638
    %640 = vadd.xlane.f32.xlu0 %v609
    %v641 = vpop.xlane.xlu0 %640
    %v642 = vstv %s589
    %v643 = vadd.f32 %v611, %v642
    %v644 = vadd.f32 %v613, %v642
    %v645 = vadd.f32 %v615, %v642
    %v646 = vadd.f32 %v617, %v642
    %v647 = vadd.f32 %v619, %v642
    %v648 = vadd.f32 %v621, %v642
    %v649 = vadd.f32 %v623, %v642
    %v650 = vadd.f32 %v625, %v642
    %v651 = vadd.f32 %v627, %v642
    %v652 = vadd.f32 %v629, %v642
    %v653 = vadd.f32 %v631, %v642
    %v654 = vadd.f32 %v633, %v642
    %v655 = vadd.f32 %v635, %v642
    %v656 = vadd.f32 %v637, %v642
    %v657 = vadd.f32 %v639, %v642
    %v658 = vadd.f32 %v641, %v642
    %v675 = vlaneseq
    %v676 = vand.u32 %v675, 127
    %v677 = vlaneseq
    %v678 = vshrl.u32 %v677, 7
    %v679 = vsub.s32 %v676, %v678
    %v680 = vrot.slane %v643, %v679
    %v681 = vadd.s32 %v676, 4294967288
    %v682 = vlaneseq
    %v683 = vshrl.u32 %v682, 7
    %v684 = vsub.s32 %v681, %v683
    %v685 = vrot.slane %v644, %v684
    %vm686 = vcmask 130112
    %v687 = vsel %vm686, %v685, %v680
    %v688 = vadd.s32 %v676, 4294967280
    %v689 = vlaneseq
    %v690 = vshrl.u32 %v689, 7
    %v691 = vsub.s32 %v688, %v690
    %v692 = vrot.slane %v645, %v691
    %vm693 = vcmask 195712
    %v694 = vsel %vm693, %v692, %v687
    %v695 = vadd.s32 %v676, 4294967272
    %v696 = vlaneseq
    %v697 = vshrl.u32 %v696, 7
    %v698 = vsub.s32 %v695, %v697
    %v699 = vrot.slane %v646, %v698
    %vm700 = vcmask 261312
    %v701 = vsel %vm700, %v699, %v694
    %v702 = vadd.s32 %v676, 4294967264
    %v703 = vlaneseq
    %v704 = vshrl.u32 %v703, 7
    %v705 = vsub.s32 %v702, %v704
    %v706 = vrot.slane %v647, %v705
    %vm707 = vcmask 326912
    %v708 = vsel %vm707, %v706, %v701
    %v709 = vadd.s32 %v676, 4294967256
    %v710 = vlaneseq
    %v711 = vshrl.u32 %v710, 7
    %v712 = vsub.s32 %v709, %v711
    %v713 = vrot.slane %v648, %v712
    %vm714 = vcmask 392512
    %v715 = vsel %vm714, %v713, %v708
    %v716 = vadd.s32 %v676, 4294967248
    %v717 = vlaneseq
    %v718 = vshrl.u32 %v717, 7
    %v719 = vsub.s32 %v716, %v718
    %v720 = vrot.slane %v649, %v719
    %vm721 = vcmask 458112
    %v722 = vsel %vm721, %v720, %v715
    %v723 = vadd.s32 %v676, 4294967240
    %v724 = vlaneseq
    %v725 = vshrl.u32 %v724, 7
    %v726 = vsub.s32 %v723, %v725
    %v727 = vrot.slane %v650, %v726
    %vm728 = vcmask 523712
    %v729 = vsel %vm728, %v727, %v722
    %v730 = vadd.s32 %v676, 4294967232
    %v731 = vlaneseq
    %v732 = vshrl.u32 %v731, 7
    %v733 = vsub.s32 %v730, %v732
    %v734 = vrot.slane %v651, %v733
    %vm735 = vcmask 589312
    %v736 = vsel %vm735, %v734, %v729
    %v737 = vadd.s32 %v676, 4294967224
    %v738 = vlaneseq
    %v739 = vshrl.u32 %v738, 7
    %v740 = vsub.s32 %v737, %v739
    %v741 = vrot.slane %v652, %v740
    %vm742 = vcmask 654912
    %v743 = vsel %vm742, %v741, %v736
    %v744 = vadd.s32 %v676, 4294967216
    %v745 = vlaneseq
    %v746 = vshrl.u32 %v745, 7
    %v747 = vsub.s32 %v744, %v746
    %v748 = vrot.slane %v653, %v747
    %vm749 = vcmask 720512
    %v750 = vsel %vm749, %v748, %v743
    %v751 = vadd.s32 %v676, 4294967208
    %v752 = vlaneseq
    %v753 = vshrl.u32 %v752, 7
    %v754 = vsub.s32 %v751, %v753
    %v755 = vrot.slane %v654, %v754
    %vm756 = vcmask 786112
    %v757 = vsel %vm756, %v755, %v750
    %v758 = vadd.s32 %v676, 4294967200
    %v759 = vlaneseq
    %v760 = vshrl.u32 %v759, 7
    %v761 = vsub.s32 %v758, %v760
    %v762 = vrot.slane %v655, %v761
    %vm763 = vcmask 851712
    %v764 = vsel %vm763, %v762, %v757
    %v765 = vadd.s32 %v676, 4294967192
    %v766 = vlaneseq
    %v767 = vshrl.u32 %v766, 7
    %v768 = vsub.s32 %v765, %v767
    %v769 = vrot.slane %v656, %v768
    %vm770 = vcmask 917312
    %v771 = vsel %vm770, %v769, %v764
    %v772 = vadd.s32 %v676, 4294967184
    %v773 = vlaneseq
    %v774 = vshrl.u32 %v773, 7
    %v775 = vsub.s32 %v772, %v774
    %v776 = vrot.slane %v657, %v775
    %vm777 = vcmask 982912
    %v778 = vsel %vm777, %v776, %v771
    %v779 = vadd.s32 %v676, 4294967176
    %v780 = vlaneseq
    %v781 = vshrl.u32 %v780, 7
    %v782 = vsub.s32 %v779, %v781
    %v783 = vrot.slane %v658, %v782
    %vm784 = vcmask 1048512
    %v785 = vsel %vm784, %v783, %v778
    %787 = vst [vmem:[#allocation5] sm:$0x1] %v785
    // Predicated region
    $region18: #{tpu_custom_call.1} parent=1 // pred_check
      _
    $region19: #{tpu_custom_call.1} parent=1 // pred_check_branch
      %789 = sbr.rel (0) target = $region21
    $region20: #{tpu_custom_call.1} parent=1 // pred_region
      %s791 = ssub.s32 16, 16
      %792 = vsyncadd [#allocation4], %s791
      %s794 = sshll.u32 [#allocation5], 4
      %s795 = int_to_ptr.vmem [resolvable:$true] %s794
      %797 = dma.vmem_to_hbm [thread:$0]  %s795, 16, %s3, [#allocation4]
    $region21: #{tpu_custom_call.1} parent=1 // pred_fallthru
      _
    // Predicated region
    $region22: #{tpu_custom_call.1} parent=1 // pred_check
      _
    $region23: #{tpu_custom_call.1} parent=1 // pred_check_branch
      %799 = sbr.rel (0) target = $region25
    $region24: #{tpu_custom_call.1} parent=1 // pred_region
      %800 = dma.done [#allocation4], 16
    $region25: #{tpu_custom_call.1} parent=1 // pred_fallthru
      _
    %801 = vsyncpa [#allocation3], 1
    %802 = vsyncpa [#allocation4], 1

</llo_original>
